<compile_context>
chip_gen: v5e
topology: v5e:2x2
jax: 0.10.0
libtpu: 0.0.40
codegen_flags: <defaults>
</compile_context>

<pallas_src>
import functools

import jax
import jax.numpy as jnp
from jax.experimental import pallas as pl
from jax.experimental.pallas import tpu as pltpu


def _round_up(x: int, m: int) -> int:
    return ((x + m - 1) // m) * m


def make_div_term(d_model: int) -> jnp.ndarray:
    # Deterministic "parameter", identical to the PyTorch buffer: (1, d_model//2).
    k = jnp.arange(0, d_model, 2, dtype=jnp.float32)
    return (1.0 / (10000.0 ** (k / d_model)))[None, :]


def _rpe_kernel(params_ref, out_ref, *, length: int, g: int):
    # params_ref: (2, lane_w)  row 0 = A[l] = div_term[(l % d_model) // 2]
    #                          row 1 = B[l] = phase(l % d_model) - (l // d_model) * A[l]
    # out_ref:    (tile_p, lane_w); packed: logical row i = p * g + (l // d_model)
    #
    # angle(p, l) = ((length-1) - i) * A[l] + phase
    #             = ((length-1) - p*g) * A[l] + B[l]
    # and sin(x + pi/2) == cos(x) folds the cos columns into the same sin.
    tile_p = out_ref.shape[0]
    p0 = pl.program_id(0) * tile_p
    row = jax.lax.broadcasted_iota(jnp.int32, (tile_p, 1), 0)           # (tile_p, 1)
    s = ((length - 1) - (p0 + row) * g).astype(jnp.float32)             # (tile_p, 1)
    a = params_ref[0:1, :]                                              # (1, lane_w)
    b = params_ref[1:2, :]                                              # (1, lane_w)
    out_ref[...] = jnp.sin(s * a + b).astype(out_ref.dtype)


def _choose_tile_rows(t_rows: int, lane_w: int) -> int:
    # ~8 MiB output tile (16 MiB double-buffered) hides the ~0.35 us per-step
    # overhead even at v7x HBM bandwidth; vmem_limit_bytes below gives headroom
    # on all of v5e/v6e/v7x.  Keep >= ~8 grid steps on large tables so the
    # "parallel" axis still shards across both v7x TensorCores.
    t_rows_pad = _round_up(t_rows, 8)
    budget = max(8, ((8 * 1024 * 1024) // (lane_w * 4)) // 8 * 8)
    target = max(8, _round_up(pl.cdiv(t_rows_pad, 8), 8))
    return min(budget, target, t_rows_pad)


def relative_positional_encoding(length: int, d_model: int,
                                 div_term: jnp.ndarray,
                                 out_dtype=jnp.float32) -> jnp.ndarray:
    """Returns pe of shape (1, 2*length - 1, d_model), matching the PyTorch module."""
    assert d_model % 2 == 0, "d_model must be even"
    T = 2 * length - 1

    # Lane packing: g logical rows per 128-lane physical row when d_model | 128;
    # otherwise emit the natural (T, d_model) layout directly (no pad + slice).
    g = 128 // d_model if (d_model <= 128 and 128 % d_model == 0) else 1
    lane_w = g * d_model
    t_rows = pl.cdiv(T, g)

    # Per-lane constants (tiny wrapper-side glue, negligible cost).
    div_flat = jnp.asarray(div_term, jnp.float32).reshape(-1)           # (d_model//2,)
    a_col = jnp.repeat(div_flat, 2)                                     # div_term[j//2]
    phase = jnp.zeros((d_model,), jnp.float32).at[1::2].set(jnp.pi / 2)
    a_lane = jnp.tile(a_col, g)                                         # (lane_w,)
    grp = (jnp.arange(lane_w) // d_model).astype(jnp.float32)           # lane // d_model
    b_lane = jnp.tile(phase, g) - grp * a_lane
    params = jnp.stack([a_lane, b_lane], axis=0)                        # (2, lane_w)

    tile_p = _choose_tile_rows(t_rows, lane_w)
    grid = (pl.cdiv(t_rows, tile_p),)

    elems = t_rows * lane_w
    out = pl.pallas_call(
        functools.partial(_rpe_kernel, length=length, g=g),
        out_shape=jax.ShapeDtypeStruct((t_rows, lane_w), out_dtype),
        grid_spec=pltpu.PrefetchScalarGridSpec(
            num_scalar_prefetch=0,
            grid=grid,
            in_specs=[pl.BlockSpec((2, lane_w), lambda i: (0, 0))],
            out_specs=pl.BlockSpec((tile_p, lane_w), lambda i: (i, 0)),
        ),
        compiler_params=pltpu.CompilerParams(
            dimension_semantics=("parallel",),
            vmem_limit_bytes=32 * 1024 * 1024),
        cost_estimate=pl.CostEstimate(
            flops=16 * elems,          # sin ~= 10-20-op VPU polynomial per element
            transcendentals=0,
            bytes_accessed=elems * jnp.dtype(out_dtype).itemsize + 2 * lane_w * 4),
    )(params)

    if g > 1:
        out = out.reshape(t_rows * g, d_model)   # contiguous row-major: free
        if t_rows * g != T:
            out = out[:T]                        # <= g-1 padded rows (T is odd)
    return out[None, :, :]                       # (1, 2*length - 1, d_model)


@functools.lru_cache(maxsize=None)
def cached_relative_positional_encoding(length: int, d_model: int) -> jnp.ndarray:
    # The table is a pure function of (length, d_model): build it once and
    # reuse across steps (eager-mode convenience; do not call under jit).
    return jax.block_until_ready(
        relative_positional_encoding(length, d_model, make_div_term(d_model)))


def _reference(length: int, d_model: int, div_term: jnp.ndarray) -> jnp.ndarray:
    # Pure-JAX mirror of the PyTorch forward, for verification only.
    position = jnp.arange(0, length, dtype=jnp.float32)[:, None]
    angles = position * div_term                                        # (L, D/2)
    pos = jnp.zeros((length, d_model), jnp.float32)
    neg = jnp.zeros((length, d_model), jnp.float32)
    pos = pos.at[:, 0::2].set(jnp.sin(angles)).at[:, 1::2].set(jnp.cos(angles))
    neg = neg.at[:, 0::2].set(jnp.sin(-angles)).at[:, 1::2].set(jnp.cos(-angles))
    pos = jnp.flip(pos, axis=0)[None]
    neg = neg[1:][None]
    return jnp.concatenate([pos, neg], axis=1)


if __name__ == "__main__":
    d_model = 32
    length = 8

    # PRNGKey used only to follow the harness convention; the module's
    # parameter (div_term) is deterministic by construction.
    _ = jax.random.PRNGKey(0)
    div_term = make_div_term(d_model)

    # Main path: lane-packed (g = 128 // 32 = 4 logical rows per physical row).
    pe = relative_positional_encoding(length, d_model, div_term)
    pe = jax.block_until_ready(pe)
    ref = _reference(length, d_model, div_term)
    assert pe.shape == (1, 2 * length - 1, d_model), pe.shape
    assert jnp.allclose(pe, ref, atol=1e-5, rtol=1e-5), "mismatch vs reference"

    # No-packing path (d_model not a divisor of 128): direct (T, d_model) output,
    # no pad + slice, trailing partial vreg masked.
    d2, l2 = 192, 5
    dt2 = make_div_term(d2)
    pe2 = jax.block_until_ready(relative_positional_encoding(l2, d2, dt2))
    assert pe2.shape == (1, 2 * l2 - 1, d2), pe2.shape
    assert jnp.allclose(pe2, _reference(l2, d2, dt2), atol=1e-5, rtol=1e-5), \
        "mismatch vs reference (no-packing path)"

    print("KERNEL_OK")
</pallas_src>

<mosaic_0001>
module attributes {stable_mosaic.version = 11 : i64} {
  func.func @_rpe_kernel(%arg0: i32, %arg1: memref<2x128xf32, #tpu.memory_space<vmem>>, %arg2: memref<8x128xf32, #tpu.memory_space<vmem>>) attributes {dimension_semantics = [#tpu.dimension_semantics<parallel>], iteration_bounds = array<i64: 1>, scalar_prefetch = 0 : i64, scratch_operands = 0 : i64, tpu.core_type = #tpu.core_type<tc>, window_params = [{pipeline_mode = #tpu.pipeline_mode<synchronous>, transform_indices = @transform_0, window_bounds = array<i64: 2, 128>}, {transform_indices = @transform_1, window_bounds = array<i64: 8, 128>}]} {
    %c8_i32 = arith.constant 8 : i32
    %0 = arith.muli %arg0, %c8_i32 : i32
    %1 = tpu.iota {dimensions = array<i32: 0>} : vector<8x1xi32>
    %2 = vector.broadcast %0 : i32 to vector<8x1xi32>
    %3 = arith.addi %2, %1 : vector<8x1xi32>
    %c4_i32 = arith.constant 4 : i32
    %4 = vector.broadcast %c4_i32 : i32 to vector<8x1xi32>
    %5 = arith.muli %3, %4 : vector<8x1xi32>
    %c7_i32 = arith.constant 7 : i32
    %6 = vector.broadcast %c7_i32 : i32 to vector<8x1xi32>
    %7 = arith.subi %6, %5 : vector<8x1xi32>
    %8 = arith.sitofp %7 : vector<8x1xi32> to vector<8x1xf32>
    %c0 = arith.constant 0 : index
    %c0_0 = arith.constant 0 : index
    %9 = vector.load %arg1[%c0, %c0_0] : memref<2x128xf32, #tpu.memory_space<vmem>>, vector<1x128xf32>
    %c1 = arith.constant 1 : index
    %c0_1 = arith.constant 0 : index
    %10 = vector.load %arg1[%c1, %c0_1] : memref<2x128xf32, #tpu.memory_space<vmem>>, vector<1x128xf32>
    %11 = vector.broadcast %8 : vector<8x1xf32> to vector<8x128xf32>
    %12 = vector.broadcast %9 : vector<1x128xf32> to vector<8x128xf32>
    %13 = arith.mulf %11, %12 : vector<8x128xf32>
    %14 = vector.broadcast %10 : vector<1x128xf32> to vector<8x128xf32>
    %15 = arith.addf %13, %14 : vector<8x128xf32>
    %16 = math.sin %15 : vector<8x128xf32>
    %c0_2 = arith.constant 0 : index
    %c0_3 = arith.constant 0 : index
    %17 = vector.load %arg2[%c0_2, %c0_3] : memref<8x128xf32, #tpu.memory_space<vmem>>, vector<8x128xf32>
    tpu.vector_store %arg2[%c0_2, %c0_3], %16 {strides = array<i32>} : memref<8x128xf32, #tpu.memory_space<vmem>>, vector<8x128xf32>,
    return
  }
  func.func @transform_0(%arg0: i32) -> (i32, i32) {
    %c0_i32 = arith.constant 0 : i32
    %c0_i32_0 = arith.constant 0 : i32
    %c0_i32_1 = arith.constant 0 : i32
    return %c0_i32, %c0_i32_0 : i32, i32
  }
  func.func @transform_1(%arg0: i32) -> (i32, i32) {
    %c0_i32 = arith.constant 0 : i32
    %c0_i32_0 = arith.constant 0 : i32
    return %arg0, %c0_i32 : i32, i32
  }
}

</mosaic_0001>

<llo_original>
// kernel: tpu_custom_call.1
$region0: #{tpu_custom_call.1}
  #allocation0 [shape = 'u32[]', space=smem, size = 0x4, offset = 0x4, fixed_abs, tag = 'smem constant byte address 0x4 - core index']
  #allocation1 [shape = 'u32[72,128]{1,0:T(1,128)}', space=vmem, size = 0x9000, scoped, tag = 'internal scratch']
  %s0 = inlined_call_operand.hbm [shape: f32[2,128], index: 0, kind: input, shape index: {}]
  %s1 = inlined_call_operand.hbm [shape: f32[4,128], index: 1, kind: output, shape index: {}]
  %s2 = sld [smem:[#allocation0]]
  $region18: #{tpu_custom_call.1} parent=0
    _
  %s4 = ssub.s32 1, %s2
  %s5 = scalar_select 0, %s4, %s2
  $region1: #{tpu_custom_call.1} parent=0
    #allocation2 [shape = 'u8[1024]{0}', space=vmem, size = 0x400, scoped, tag = 'input window, operand 0, single buffered']
    #allocation3 [shape = 's32[1]{0}', space=sflag, size = 0x4, scoped, tag = 'scoped memory for tpu_custom_call.1']
    #allocation4 [shape = 's32[1]{0}', space=sflag, size = 0x4, scoped, tag = 'scoped memory for tpu_custom_call.1']
    #allocation5 [shape = 'u8[4096]{0}', space=vmem, size = 0x1000, scoped, tag = 'output window, operand 0, single buffered']
    %6 = vsyncpa [#allocation3], 0
    %7 = vsyncpa [#allocation4], 0
    // Predicated region
    $region2: #{tpu_custom_call.1} parent=1 // pred_check
      _
    $region3: #{tpu_custom_call.1} parent=1 // pred_check_branch
      %9 = sbr.rel (0) target = $region5
    $region4: #{tpu_custom_call.1} parent=1 // pred_region
      %11 = vsyncadd [#allocation3], 0
      %s13 = sshll.u32 %s0, 4
      %s14 = int_to_ptr.hbm [resolvable:$true] %s13
      %s15 = sshll.u32 [#allocation2], 4
      %s16 = int_to_ptr.vmem [resolvable:$true] %s15
      %18 = dma.hbm_to_vmem [thread:$0]  %s14, 32, %s16, [#allocation3]
    $region5: #{tpu_custom_call.1} parent=1 // pred_fallthru
      _
    // Predicated region
    $region6: #{tpu_custom_call.1} parent=1 // pred_check
      _
    $region7: #{tpu_custom_call.1} parent=1 // pred_check_branch
      %20 = sbr.rel (0) target = $region9
    $region8: #{tpu_custom_call.1} parent=1 // pred_region
      %22 = dma.done [#allocation3], 32
    $region9: #{tpu_custom_call.1} parent=1 // pred_fallthru
      _
    %s23 = smul.u32 0, 8
    %v24 = vlaneseq
    %v25 = vshrl.u32 %v24, 7
    %v26 = vstv %s23
    %v27 = vadd.s32 %v26, %v25
    %v28 = vmul.u32 %v27, 4
    %v29 = vsub.s32 7, %v28
    %v30 = vcvt.s32.f32 %v29
    %v31 = vld [vmem:[#allocation2] sm:$0x1]
    %v32 = vld [vmem:[#allocation2 + $0x1] sm:$0x1]
    %v33 = vperm.slane %v31, 0
    %v34 = vmul.f32 %v30, %v33
    %v35 = vperm.slane %v32, 0
    %v36 = vadd.f32 %v34, %v35
    %v37 = vand.u32 2147483647, %v36
    %vm38 = vcmp.le.f32.partialorder %v37, 0.7853982
    %vm39 = vcmp.lt.s32.totalorder %v36, 0
    %v40 = vand.u32 %v36, 2139095040
    %v41 = vshrl.u32 %v40, 23
    %v42 = vsub.s32 %v41, 127
    %v43 = vand.u32 2147483647, %v36
    %v44 = vand.u32 %v43, 8388607
    %v45 = vor.u32 %v44, 8388608
    %v46 = vsub.s32 0, %v45
    %v47 = vadd.s32 %v42, 1
    %vm48 = vcmp.gt.s32.totalorder %v47, 0
    %v49 = vsel %vm48, %v47, 0
    %v50 = vshrl.u32 %v49, 5
    %v51 = vand.u32 %v49, 31
    %v52 = vsub.s32 32, %v51
    %v53 = vshrl.u32 683565275, %v52
    %v54 = vshll.u32 683565275, %v51
    %v55 = vshrl.u32 2475754826, %v52
    %v56 = vor.u32 %v54, %v55
    %v57 = vshll.u32 2475754826, %v51
    %v58 = vshrl.u32 2131351028, %v52
    %v59 = vor.u32 %v57, %v58
    %v60 = vshll.u32 2131351028, %v51
    %v61 = vshrl.u32 2102212464, %v52
    %v62 = vor.u32 %v60, %v61
    %v63 = vshll.u32 2102212464, %v51
    %v64 = vshrl.u32 920167782, %v52
    %v65 = vor.u32 %v63, %v64
    %v66 = vshll.u32 920167782, %v51
    %v67 = vshrl.u32 1326507024, %v52
    %v68 = vor.u32 %v66, %v67
    %vm69 = vcmp.lt.s32.totalorder %v50, 1
    %vm70 = vcmp.lt.s32.totalorder %v50, 2
    %vm71 = vcmp.lt.s32.totalorder %v50, 3
    %vm72 = vcmp.lt.s32.totalorder %v50, 4
    %v73 = vsel %vm69, %v53, %v56
    %v74 = vsel %vm72, %v62, 2102212464
    %v75 = vsel %vm71, %v59, %v74
    %v76 = vsel %vm70, %v73, %v75
    %v77 = vsel %vm69, %v56, %v59
    %v78 = vsel %vm72, %v65, 920167782
    %v79 = vsel %vm71, %v62, %v78
    %v80 = vsel %vm70, %v77, %v79
    %v81 = vsel %vm69, %v59, %v62
    %v82 = vsel %vm72, %v68, 1326507024
    %v83 = vsel %vm71, %v65, %v82
    %v84 = vsel %vm70, %v81, %v83
    %v85 = vshll.u32 %v45, 8
    %v86 = vand.u32 %v85, 65535
    %v87 = vshrl.u32 %v85, 16
    %v88 = vand.u32 %v84, 65535
    %v89 = vshrl.u32 %v84, 16
    %v90 = vmul.u32 %v86, %v88
    %v91 = vmul.u32 %v86, %v89
    %v92 = vmul.u32 %v87, %v88
    %v93 = vmul.u32 %v87, %v89
    %v94 = vshll.u32 %v91, 16
    %v95 = vshrl.u32 %v91, 16
    %v96 = vshll.u32 %v92, 16
    %v97 = vshrl.u32 %v92, 16
    %vm98 = vc.u32 %v90, %v94
    %v99 = vsel %vm98, 1, 0
    %v100 = vadd.s32 %v90, %v94
    %v101 = vadd.s32 %v93, %v99
    %vm102 = vc.u32 %v100, %v96
    %v103 = vsel %vm102, 1, 0
    %v104 = vadd.s32 %v100, %v96
    %v105 = vadd.s32 %v101, %v103
    %v106 = vadd.s32 %v105, %v95
    %v107 = vadd.s32 %v106, %v97
    %v108 = vand.u32 %v85, 65535
    %v109 = vshrl.u32 %v85, 16
    %v110 = vand.u32 %v80, 65535
    %v111 = vshrl.u32 %v80, 16
    %v112 = vmul.u32 %v108, %v110
    %v113 = vmul.u32 %v108, %v111
    %v114 = vmul.u32 %v109, %v110
    %v115 = vmul.u32 %v109, %v111
    %v116 = vshll.u32 %v113, 16
    %v117 = vshrl.u32 %v113, 16
    %v118 = vshll.u32 %v114, 16
    %v119 = vshrl.u32 %v114, 16
    %vm120 = vc.u32 %v112, %v116
    %v121 = vsel %vm120, 1, 0
    %v122 = vadd.s32 %v112, %v116
    %v123 = vadd.s32 %v115, %v121
    %vm124 = vc.u32 %v122, %v118
    %v125 = vsel %vm124, 1, 0
    %v126 = vadd.s32 %v122, %v118
    %v127 = vadd.s32 %v123, %v125
    %v128 = vadd.s32 %v127, %v117
    %v129 = vadd.s32 %v128, %v119
    %v130 = vmul.u32 %v85, %v76
    %v131 = vadd.s32 %v107, %v126
    %vm132 = vc.u32 %v107, %v126
    %v133 = vadd.s32 %v129, 1
    %v134 = vsel %vm132, %v133, %v129
    %v135 = vadd.s32 %v130, %v134
    %v136 = vadd.s32 %v135, 536870912
    %v137 = vshrl.u32 %v136, 30
    %v138 = vshll.u32 %v137, 30
    %v139 = vsub.s32 %v135, %v138
    %vm140 = vcmp.lt.s32.totalorder %v139, 0
    %v141 = vsub.s32 0, %v139
    %v142 = vsel %vm140, %v141, %v139
    %v143 = vclz %v142
    %v144 = vsub.s32 %v143, 2
    %vm145 = vcmp.gt.s32.totalorder 0, %v144
    %v146 = vsel %vm145, 0, %v144
    %v147 = vsub.s32 32, %v146
    %v148 = vshll.u32 %v139, %v146
    %v149 = vshrl.u32 %v131, %v147
    %v150 = vor.u32 %v148, %v149
    %v151 = vsub.s32 4294967266, %v146
    %v152 = vadd.s32 %v151, 127
    %v153 = vshll.u32 %v152, 23
    %v154 = vor.u32 4788187, %v153
    %v155 = vand.u32 2147483647, %v154
    %v157 = vcvt.s32.f32 %v150
    %v158 = vmul.f32 %v157, %v155
    %v159 = vxor.u32 %v158, 2147483648
    %v160 = vsel %vm39, %v159, %v158
    %v161 = vsub.s32 4, %v137
    %v162 = vsel %vm39, %v161, %v137
    %v163 = vsel %vm38, %v36, %v160
    %v164 = vsel %vm38, 0, %v162
    %v165 = vmul.f32 %v163, %v163
    %v166 = vmul.f32 %v165, -0.001358992
    %v167 = vadd.f32 %v166, 0.041655596
    %v168 = vmul.f32 %v165, %v167
    %v169 = vadd.f32 %v168, -0.4999988
    %v170 = vmul.f32 %v165, %v169
    %v171 = vadd.f32 1.0, %v170
    %v172 = vmul.f32 %v163, %v163
    %v173 = vmul.f32 %v172, -0.00019511016
    %v174 = vadd.f32 %v173, 0.008332121
    %v175 = vmul.f32 %v172, %v174
    %v176 = vadd.f32 %v175, -0.16666654
    %v177 = vmul.f32 %v172, %v176
    %v178 = vadd.f32 %v177, 1.0
    %v179 = vmul.f32 %v178, %v163
    %vm180 = vweird.f32 %v36
    %v181 = vadd.s32 %v164, 3
    %v182 = vand.u32 %v181, 3
    %vm183 = vcmp.lt.s32.totalorder %v182, 2
    %vm184 = vcmp.eq.s32.totalorder %v182, 0
    %v185 = vxor.u32 %v179, 2147483648
    %v186 = vsel %vm184, %v171, %v185
    %vm187 = vcmp.eq.s32.totalorder %v182, 2
    %v188 = vxor.u32 %v171, 2147483648
    %v189 = vsel %vm187, %v188, %v179
    %v190 = vsel %vm183, %v186, %v189
    %v191 = vsel %vm180, nan, %v190
    %192 = vst [vmem:[#allocation5] sm:$0xff] %v191
    // Predicated region
    $region10: #{tpu_custom_call.1} parent=1 // pred_check
      _
    $region11: #{tpu_custom_call.1} parent=1 // pred_check_branch
      %194 = sbr.rel (0) target = $region13
    $region12: #{tpu_custom_call.1} parent=1 // pred_region
      %196 = vsyncadd [#allocation4], 64
      %s197 = sshll.u32 [#allocation5], 4
      %s198 = int_to_ptr.vmem [resolvable:$true] %s197
      %s199 = sshll.u32 %s1, 4
      %s200 = int_to_ptr.hbm [resolvable:$true] %s199
      %205 = dma.vmem_to_hbm [thread:$0]  %s198, 64, %s200, [#allocation4], 64, 64, 4
    $region13: #{tpu_custom_call.1} parent=1 // pred_fallthru
      _
    // Predicated region
    $region14: #{tpu_custom_call.1} parent=1 // pred_check
      _
    $region15: #{tpu_custom_call.1} parent=1 // pred_check_branch
      %207 = sbr.rel (0) target = $region17
    $region16: #{tpu_custom_call.1} parent=1 // pred_region
      %209 = dma.done [#allocation4], 128
    $region17: #{tpu_custom_call.1} parent=1 // pred_fallthru
      _
    %210 = vsyncpa [#allocation3], 1
    %211 = vsyncpa [#allocation4], 1

</llo_original>
